<compile_context>
chip_gen: v5e
topology: v5e:2x2
jax: 0.10.0
libtpu: 0.0.40
codegen_flags: <defaults>
</compile_context>

<pallas_src>
import functools

import jax
import jax.numpy as jnp
from jax.experimental import pallas as pl
from jax.experimental.pallas import tpu as pltpu


def _style_vectorizer_kernel(x_ref, *refs, negative_slope):
    # x_ref : (B_TILE, N, IN)  -- one tile of batches, full sequence, full feature dim
    # refs  : (W0T, b0, W1T, b1, ..., W{L-1}T, b{L-1}, out)
    #         WiT: (K_i, M_i) bf16, = (weight_i * lr_mul).T (lr_mul pre-folded)
    #         bi : (1, M_i)  f32,  = bias_i * lr_mul        (lr_mul pre-folded)
    o_ref = refs[-1]
    wb_refs = refs[:-1]
    n_layers = len(wb_refs) // 2

    bt, n, in_dim = x_ref.shape

    # --- F.normalize(x, dim=1): L2 norm over the sequence axis per (batch, feature) column.
    # Sum-of-squares in f32; rsqrt + broadcast multiply instead of a full-tile divide.
    xf = x_ref[...].astype(jnp.float32)                          # (bt, n, IN)
    sq = jnp.sum(xf * xf, axis=1, keepdims=True)                 # (bt, 1, IN)  (XLU reduce)
    inv = jax.lax.rsqrt(jnp.maximum(sq, 1e-24))                  # == 1 / max(||x||_2, 1e-12)
    h = ((xf * inv).reshape(bt * n, in_dim)).astype(jnp.bfloat16)  # stacked rows, bf16 MXU operand

    # --- depth x [EqualLinear ; LeakyReLU(0.2)], statically unrolled.
    y = None
    for li in range(n_layers):
        w_t = wb_refs[2 * li][...]                               # (K, M) bf16, lr_mul folded
        bias_row = wb_refs[2 * li + 1][...]                      # (1, M) f32,  lr_mul folded
        y = jnp.dot(h, w_t, preferred_element_type=jnp.float32) + bias_row
        y = jnp.where(y > 0.0, y, negative_slope * y)            # LeakyReLU(0.2) in f32
        h = y.astype(jnp.bfloat16)                               # next layer's MXU operand

    # Final layer output written from the full-precision f32 activation.
    o_ref[...] = y.reshape(bt, n, o_ref.shape[-1]).astype(o_ref.dtype)


def _choose_b_tile(b, n, *, target_rows=256, min_steps=2):
    """Pick a batch tile: >=min_steps grid steps when possible (v7x 2-TC split + DMA/compute
    overlap), and the smallest such tile that still stacks >=target_rows rows per matmul
    (maximizes step count subject to filling an MXU pass on v6e/v7x)."""
    divisors = [t for t in range(1, b + 1) if b % t == 0]
    viable = [t for t in divisors if (b // t) >= min_steps] or [b]
    big_enough = [t for t in viable if t * n >= target_rows]
    return min(big_enough) if big_enough else max(viable)


def style_vectorizer_pallas(x_bnf, weights, biases, *, lr_mul, b_tile=None):
    """x_bnf: (b, n, in_dim); weights[i]: (out_i, in_i); biases[i]: (out_i,)."""
    b, n, in_dim = x_bnf.shape
    out_dim = weights[-1].shape[0]
    if b_tile is None:
        b_tile = _choose_b_tile(b, n)
    assert b % b_tile == 0

    wb_inputs = []
    in_specs = [pl.BlockSpec((b_tile, n, in_dim), lambda i: (i, 0, 0))]
    matmul_flops = 0
    wb_bytes = 0
    max_dim = in_dim
    for w, bias in zip(weights, biases):
        # Fold lr_mul into the params once per call (outside the grid loop), transpose once,
        # and hand the MXU bf16 weights; biases stay f32 for the VPU add.
        w_t = (jnp.transpose(w) * lr_mul).astype(jnp.bfloat16)   # (in_i, out_i)
        b2d = (bias * lr_mul).reshape(1, -1).astype(jnp.float32)  # (1, out_i)
        wb_inputs += [w_t, b2d]
        # Constant index maps: the same block is reused across all grid steps.
        in_specs += [
            pl.BlockSpec(w_t.shape, lambda i: (0, 0)),
            pl.BlockSpec(b2d.shape, lambda i: (0, 0)),
        ]
        matmul_flops += 2 * b * n * w.shape[0] * w.shape[1]
        wb_bytes += w_t.size * 2 + b2d.size * 4
        max_dim = max(max_dim, w.shape[0])

    # Advisory cost estimate so XLA schedules the surrounding rearranges around the call.
    x_bytes = b * n * in_dim * jnp.dtype(x_bnf.dtype).itemsize
    o_bytes = b * n * out_dim * jnp.dtype(x_bnf.dtype).itemsize
    cost = pl.CostEstimate(
        flops=matmul_flops + 4 * b * n * in_dim,     # matmuls + normalize (sq/sum/mul)
        transcendentals=b * in_dim,                  # rsqrt per (batch, feature) column
        bytes_accessed=x_bytes + o_bytes + wb_bytes,
    )

    # Generation-aware VMEM budget: double-buffered in/out tiles + resident (double-buffered)
    # weights/biases + f32/bf16 intermediates, with margin; clamp to [16 MiB, 48 MiB]
    # (v7x scoped default is 32 MiB of 64 MiB physical; v5e scoped default is 16 MiB).
    io_bytes = 2 * (b_tile * n * in_dim * 4 + b_tile * n * out_dim * 4)
    act_bytes = 6 * b_tile * n * max_dim * 4
    vmem_needed = int(1.5 * (io_bytes + 2 * wb_bytes + act_bytes))
    vmem_limit = min(max(16 * 1024 * 1024, vmem_needed), 48 * 1024 * 1024)

    kernel = functools.partial(_style_vectorizer_kernel, negative_slope=0.2)

    return pl.pallas_call(
        kernel,
        out_shape=jax.ShapeDtypeStruct((b, n, out_dim), x_bnf.dtype),
        grid_spec=pltpu.PrefetchScalarGridSpec(
            num_scalar_prefetch=0,
            grid=(b // b_tile,),
            in_specs=in_specs,
            out_specs=pl.BlockSpec((b_tile, n, out_dim), lambda i: (i, 0, 0)),
        ),
        compiler_params=pltpu.CompilerParams(
            dimension_semantics=("parallel",),
            vmem_limit_bytes=vmem_limit,
        ),
        cost_estimate=cost,
    )(x_bnf, *wb_inputs)


@functools.partial(jax.jit, static_argnames=("out_heads", "lr_mul", "b_tile"))
def style_vectorizer_forward(x, weights, biases, *, out_heads, lr_mul=1.0, b_tile=None):
    """Full module forward: (b, h, n, d) -> (b, out_heads, n, dim_emb // out_heads)."""
    b, h, n, d = x.shape
    in_dim = h * d
    out_dim = weights[-1].shape[0]
    assert weights[0].shape[1] == in_dim
    assert out_dim % out_heads == 0

    # rearrange 'b h n d -> b n (h d)'  (inside the same jit so XLA can fuse it)
    x_bnf = jnp.transpose(x, (0, 2, 1, 3)).reshape(b, n, in_dim)

    y = style_vectorizer_pallas(x_bnf, weights, biases, lr_mul=lr_mul, b_tile=b_tile)

    # rearrange 'b n (h d) -> b h n d', h = out_heads
    d_out = out_dim // out_heads
    return jnp.transpose(y.reshape(b, n, out_heads, d_out), (0, 2, 1, 3))


def _reference(x, weights, biases, out_heads, lr_mul):
    """Pure-JAX (f32) port of the PyTorch StyleVectorizer.forward."""
    b, h, n, d = x.shape
    y = jnp.transpose(x, (0, 2, 1, 3)).reshape(b, n, h * d)
    denom = jnp.maximum(jnp.sqrt(jnp.sum(y * y, axis=1, keepdims=True)), 1e-12)
    y = y / denom
    for w, bb in zip(weights, biases):
        y = y @ (w * lr_mul).T + bb * lr_mul      # EqualLinear
        y = jnp.where(y > 0, y, 0.2 * y)          # LeakyReLU(0.2)
    out_dim = weights[-1].shape[0]
    y = y.reshape(b, n, out_heads, out_dim // out_heads)
    return jnp.transpose(y, (0, 2, 1, 3))


if __name__ == "__main__":
    # StyleVectorizer(dim_in=32, dim_emb=128, depth=3, heads=4, lr_mul=0.1)
    b, h, n, d = 2, 4, 8, 8            # input (b, h, n, d); dim_in = h*d = 32
    dim_in, dim_emb, depth = h * d, 128, 3
    out_heads, lr_mul = 4, 0.1

    key = jax.random.PRNGKey(0)
    kx, *kws = jax.random.split(key, 1 + 2 * depth)

    x = jax.random.normal(kx, (b, h, n, d), dtype=jnp.float32)
    weights, biases = [], []
    for i in range(depth):
        k_in = dim_in if i == 0 else dim_emb
        # EqualLinear init: weight ~ N(0, 1); bias is zeros in the module — use small random
        # values here so the bias path is actually exercised numerically.
        weights.append(jax.random.normal(kws[2 * i], (dim_emb, k_in), jnp.float32))
        biases.append(0.1 * jax.random.normal(kws[2 * i + 1], (dim_emb,), jnp.float32))

    out = style_vectorizer_forward(x, weights, biases, out_heads=out_heads, lr_mul=lr_mul)
    out = jax.block_until_ready(out)

    ref = _reference(x, weights, biases, out_heads, lr_mul)
    assert out.shape == (b, out_heads, n, dim_emb // out_heads)
    # bf16 MXU operands (f32 accumulation) vs the f32 reference: loosened tolerance per review.
    assert jnp.allclose(out, ref, atol=5e-2, rtol=5e-2), float(jnp.max(jnp.abs(out - ref)))

    print("KERNEL_OK")
</pallas_src>

<mosaic_0001>
module attributes {stable_mosaic.version = 11 : i64} {
  func.func @_style_vectorizer_kernel(%arg0: i32, %arg1: memref<1x8x32xf32, #tpu.memory_space<vmem>>, %arg2: memref<32x128xbf16, #tpu.memory_space<vmem>>, %arg3: memref<1x128xf32, #tpu.memory_space<vmem>>, %arg4: memref<128x128xbf16, #tpu.memory_space<vmem>>, %arg5: memref<1x128xf32, #tpu.memory_space<vmem>>, %arg6: memref<128x128xbf16, #tpu.memory_space<vmem>>, %arg7: memref<1x128xf32, #tpu.memory_space<vmem>>, %arg8: memref<1x8x128xf32, #tpu.memory_space<vmem>>) attributes {dimension_semantics = [#tpu.dimension_semantics<parallel>], iteration_bounds = array<i64: 2>, scalar_prefetch = 0 : i64, scratch_operands = 0 : i64, tpu.core_type = #tpu.core_type<tc>, window_params = [{transform_indices = @transform_0, window_bounds = array<i64: 1, 8, 32>}, {pipeline_mode = #tpu.pipeline_mode<synchronous>, transform_indices = @transform_1, window_bounds = array<i64: 32, 128>}, {pipeline_mode = #tpu.pipeline_mode<synchronous>, transform_indices = @transform_2, window_bounds = array<i64: 1, 128>}, {pipeline_mode = #tpu.pipeline_mode<synchronous>, transform_indices = @transform_3, window_bounds = array<i64: 128, 128>}, {pipeline_mode = #tpu.pipeline_mode<synchronous>, transform_indices = @transform_4, window_bounds = array<i64: 1, 128>}, {pipeline_mode = #tpu.pipeline_mode<synchronous>, transform_indices = @transform_5, window_bounds = array<i64: 128, 128>}, {pipeline_mode = #tpu.pipeline_mode<synchronous>, transform_indices = @transform_6, window_bounds = array<i64: 1, 128>}, {transform_indices = @transform_7, window_bounds = array<i64: 1, 8, 128>}]} {
    %c0 = arith.constant 0 : index
    %c0_0 = arith.constant 0 : index
    %c0_1 = arith.constant 0 : index
    %0 = vector.load %arg1[%c0, %c0_0, %c0_1] : memref<1x8x32xf32, #tpu.memory_space<vmem>>, vector<1x8x32xf32>
    %1 = arith.mulf %0, %0 : vector<1x8x32xf32>
    %cst = arith.constant dense<0.000000e+00> : vector<1x32xf32>
    %2 = vector.multi_reduction <add>, %1, %cst [1] : vector<1x8x32xf32> to vector<1x32xf32>
    %3 = vector.shape_cast %2 : vector<1x32xf32> to vector<1x1x32xf32>
    %cst_2 = arith.constant 1.000000e-24 : f32
    %4 = vector.broadcast %cst_2 : f32 to vector<1x1x32xf32>
    %5 = arith.maximumf %3, %4 : vector<1x1x32xf32>
    %6 = math.rsqrt %5 : vector<1x1x32xf32>
    %7 = vector.broadcast %6 : vector<1x1x32xf32> to vector<1x8x32xf32>
    %8 = arith.mulf %0, %7 : vector<1x8x32xf32>
    %9 = vector.shape_cast %8 : vector<1x8x32xf32> to vector<8x32xf32>
    %10 = arith.truncf %9 : vector<8x32xf32> to vector<8x32xbf16>
    %c0_3 = arith.constant 0 : index
    %c0_4 = arith.constant 0 : index
    %11 = vector.load %arg2[%c0_3, %c0_4] : memref<32x128xbf16, #tpu.memory_space<vmem>>, vector<32x128xbf16>
    %c0_5 = arith.constant 0 : index
    %c0_6 = arith.constant 0 : index
    %12 = vector.load %arg3[%c0_5, %c0_6] : memref<1x128xf32, #tpu.memory_space<vmem>>, vector<1x128xf32>
    %cst_7 = arith.constant dense<0.000000e+00> : vector<8x128xf32>
    %13 = tpu.matmul %10, %11, %cst_7 {dimension_numbers = #tpu.dot_dimension_numbers<[1], [0], [0], [1], [0, 0, 1, 1], [], []>} : vector<8x32xbf16>, vector<32x128xbf16>, vector<8x128xf32> -> vector<8x128xf32>
    %14 = vector.broadcast %12 : vector<1x128xf32> to vector<8x128xf32>
    %15 = arith.addf %13, %14 : vector<8x128xf32>
    %cst_8 = arith.constant 0.000000e+00 : f32
    %16 = vector.broadcast %cst_8 : f32 to vector<8x128xf32>
    %17 = arith.cmpf ogt, %15, %16 : vector<8x128xf32>
    %cst_9 = arith.constant 2.000000e-01 : f32
    %18 = vector.broadcast %cst_9 : f32 to vector<8x128xf32>
    %19 = arith.mulf %18, %15 : vector<8x128xf32>
    %20 = arith.select %17, %15, %19 : vector<8x128xi1>, vector<8x128xf32>
    %21 = arith.truncf %20 : vector<8x128xf32> to vector<8x128xbf16>
    %c0_10 = arith.constant 0 : index
    %c0_11 = arith.constant 0 : index
    %22 = vector.load %arg4[%c0_10, %c0_11] : memref<128x128xbf16, #tpu.memory_space<vmem>>, vector<128x128xbf16>
    %c0_12 = arith.constant 0 : index
    %c0_13 = arith.constant 0 : index
    %23 = vector.load %arg5[%c0_12, %c0_13] : memref<1x128xf32, #tpu.memory_space<vmem>>, vector<1x128xf32>
    %cst_14 = arith.constant dense<0.000000e+00> : vector<8x128xf32>
    %24 = tpu.matmul %21, %22, %cst_14 {dimension_numbers = #tpu.dot_dimension_numbers<[1], [0], [0], [1], [0, 0, 1, 1], [], []>} : vector<8x128xbf16>, vector<128x128xbf16>, vector<8x128xf32> -> vector<8x128xf32>
    %25 = vector.broadcast %23 : vector<1x128xf32> to vector<8x128xf32>
    %26 = arith.addf %24, %25 : vector<8x128xf32>
    %cst_15 = arith.constant 0.000000e+00 : f32
    %27 = vector.broadcast %cst_15 : f32 to vector<8x128xf32>
    %28 = arith.cmpf ogt, %26, %27 : vector<8x128xf32>
    %cst_16 = arith.constant 2.000000e-01 : f32
    %29 = vector.broadcast %cst_16 : f32 to vector<8x128xf32>
    %30 = arith.mulf %29, %26 : vector<8x128xf32>
    %31 = arith.select %28, %26, %30 : vector<8x128xi1>, vector<8x128xf32>
    %32 = arith.truncf %31 : vector<8x128xf32> to vector<8x128xbf16>
    %c0_17 = arith.constant 0 : index
    %c0_18 = arith.constant 0 : index
    %33 = vector.load %arg6[%c0_17, %c0_18] : memref<128x128xbf16, #tpu.memory_space<vmem>>, vector<128x128xbf16>
    %c0_19 = arith.constant 0 : index
    %c0_20 = arith.constant 0 : index
    %34 = vector.load %arg7[%c0_19, %c0_20] : memref<1x128xf32, #tpu.memory_space<vmem>>, vector<1x128xf32>
    %cst_21 = arith.constant dense<0.000000e+00> : vector<8x128xf32>
    %35 = tpu.matmul %32, %33, %cst_21 {dimension_numbers = #tpu.dot_dimension_numbers<[1], [0], [0], [1], [0, 0, 1, 1], [], []>} : vector<8x128xbf16>, vector<128x128xbf16>, vector<8x128xf32> -> vector<8x128xf32>
    %36 = vector.broadcast %34 : vector<1x128xf32> to vector<8x128xf32>
    %37 = arith.addf %35, %36 : vector<8x128xf32>
    %cst_22 = arith.constant 0.000000e+00 : f32
    %38 = vector.broadcast %cst_22 : f32 to vector<8x128xf32>
    %39 = arith.cmpf ogt, %37, %38 : vector<8x128xf32>
    %cst_23 = arith.constant 2.000000e-01 : f32
    %40 = vector.broadcast %cst_23 : f32 to vector<8x128xf32>
    %41 = arith.mulf %40, %37 : vector<8x128xf32>
    %42 = arith.select %39, %37, %41 : vector<8x128xi1>, vector<8x128xf32>
    %43 = vector.shape_cast %42 : vector<8x128xf32> to vector<1x8x128xf32>
    %c0_24 = arith.constant 0 : index
    %c0_25 = arith.constant 0 : index
    %c0_26 = arith.constant 0 : index
    %44 = vector.load %arg8[%c0_24, %c0_25, %c0_26] : memref<1x8x128xf32, #tpu.memory_space<vmem>>, vector<1x8x128xf32>
    tpu.vector_store %arg8[%c0_24, %c0_25, %c0_26], %43 {strides = array<i32>} : memref<1x8x128xf32, #tpu.memory_space<vmem>>, vector<1x8x128xf32>,
    return
  }
  func.func @transform_0(%arg0: i32) -> (i32, i32, i32) {
    %c0_i32 = arith.constant 0 : i32
    %c0_i32_0 = arith.constant 0 : i32
    %c0_i32_1 = arith.constant 0 : i32
    return %arg0, %c0_i32, %c0_i32_0 : i32, i32, i32
  }
  func.func @transform_1(%arg0: i32) -> (i32, i32) {
    %c0_i32 = arith.constant 0 : i32
    %c0_i32_0 = arith.constant 0 : i32
    %c0_i32_1 = arith.constant 0 : i32
    return %c0_i32, %c0_i32_0 : i32, i32
  }
  func.func @transform_2(%arg0: i32) -> (i32, i32) {
    %c0_i32 = arith.constant 0 : i32
    %c0_i32_0 = arith.constant 0 : i32
    %c0_i32_1 = arith.constant 0 : i32
    return %c0_i32, %c0_i32_0 : i32, i32
  }
  func.func @transform_3(%arg0: i32) -> (i32, i32) {
    %c0_i32 = arith.constant 0 : i32
    %c0_i32_0 = arith.constant 0 : i32
    %c0_i32_1 = arith.constant 0 : i32
    return %c0_i32, %c0_i32_0 : i32, i32
  }
  func.func @transform_4(%arg0: i32) -> (i32, i32) {
    %c0_i32 = arith.constant 0 : i32
    %c0_i32_0 = arith.constant 0 : i32
    %c0_i32_1 = arith.constant 0 : i32
    return %c0_i32, %c0_i32_0 : i32, i32
  }
  func.func @transform_5(%arg0: i32) -> (i32, i32) {
    %c0_i32 = arith.constant 0 : i32
    %c0_i32_0 = arith.constant 0 : i32
    %c0_i32_1 = arith.constant 0 : i32
    return %c0_i32, %c0_i32_0 : i32, i32
  }
  func.func @transform_6(%arg0: i32) -> (i32, i32) {
    %c0_i32 = arith.constant 0 : i32
    %c0_i32_0 = arith.constant 0 : i32
    %c0_i32_1 = arith.constant 0 : i32
    return %c0_i32, %c0_i32_0 : i32, i32
  }
  func.func @transform_7(%arg0: i32) -> (i32, i32, i32) {
    %c0_i32 = arith.constant 0 : i32
    %c0_i32_0 = arith.constant 0 : i32
    %c0_i32_1 = arith.constant 0 : i32
    return %arg0, %c0_i32, %c0_i32_0 : i32, i32, i32
  }
}

</mosaic_0001>

<llo_original>
// kernel: style_vectorizer_forward.1
$region0: #{style_vectorizer_forward.1}
  #allocation0 [shape = 'u32[]', space=smem, size = 0x4, offset = 0x4, fixed_abs, tag = 'smem constant byte address 0x4 - core index']
  #allocation1 [shape = 'u32[72,128]{1,0:T(1,128)}', space=vmem, size = 0x9000, scoped, tag = 'internal scratch']
  %s0 = inlined_call_operand.vmem [shape: f32[2,8,32], index: 0, kind: input, shape index: {}]
  %s1 = inlined_call_operand.vmem [shape: bf16[32,128], index: 1, kind: input, shape index: {}]
  %s2 = inlined_call_operand.vmem [shape: f32[1,128], index: 2, kind: input, shape index: {}]
  %s3 = inlined_call_operand.vmem [shape: bf16[128,128], index: 3, kind: input, shape index: {}]
  %s4 = inlined_call_operand.vmem [shape: f32[1,128], index: 4, kind: input, shape index: {}]
  %s5 = inlined_call_operand.vmem [shape: bf16[128,128], index: 5, kind: input, shape index: {}]
  %s6 = inlined_call_operand.vmem [shape: f32[1,128], index: 6, kind: input, shape index: {}]
  %s7 = inlined_call_operand.vmem [shape: f32[2,8,128], index: 7, kind: output, shape index: {}]
  %s8 = sld [smem:[#allocation0]]
  $region61: #{style_vectorizer_forward.1} parent=0
    _
  %s10 = ssub.s32 1, %s8
  %s11 = scalar_select 0, %s10, %s8
  loop: start=0, step=1, limit=4
  $region2: #{style_vectorizer_forward.1} parent=0 // loop_pre_header
    _
  $region3: #{style_vectorizer_forward.1} parent=0 // loop_header
    %s13 = sphi 0, %s17
    %p14 = scmp.ge.s32.totalorder %s13, 4
    %s23 = sphi 0, %s25
    %s26 = sphi 0, %s23
    %s27 = sphi 0, %s26
    %s43 = sphi 0, %s27
    %s47 = sphi 0, %s47
    %s49 = sphi 0, %s47
    %s50 = sphi 0, %s49
    %s64 = sphi 0, %s50
    %s68 = sphi 0, %s68
    %s70 = sphi 0, %s68
    %s71 = sphi 0, %s70
    %s85 = sphi 0, %s71
    %s89 = sphi 0, %s89
    %s91 = sphi 0, %s89
    %s92 = sphi 0, %s91
    %s106 = sphi 0, %s92
    %s110 = sphi 0, %s110
    %s112 = sphi 0, %s110
    %s113 = sphi 0, %s112
    %s127 = sphi 0, %s113
    %s131 = sphi 0, %s131
    %s133 = sphi 0, %s131
    %s134 = sphi 0, %s133
    %s148 = sphi 0, %s134
    %s152 = sphi 0, %s152
    %s154 = sphi 0, %s152
    %s155 = sphi 0, %s154
    %s169 = sphi 0, %s155
    %s175 = sphi 0, %s177
    %s178 = sphi 0, %s175
    %s179 = sphi 0, %s178
    %s195 = sphi 0, %s179
  $region4: #{style_vectorizer_forward.1} parent=0 // loop_header_branch
    %16 = sbr.rel (%p14) target = $region8
  $region5: #{style_vectorizer_forward.1} parent=0 // loop_body
    %s18 = ssub.s32 %s13, 1
    %s19 = ssub.s32 %s13, 2
    %s20 = sadd.s32 %s13, 1
    %s21 = ssub.s32 %s13, %s20
    %p22 = scmp.eq.s32.totalorder %s21, 0
    %s24 = sadd.s32 %s23, 1
    %s25 = scalar_select %p22, %s23, %s24
    %p28 = pneg %p22
    %p29 = scmp.eq.s32.totalorder %s13, 1
    %p30 = por %p28, %p29
    %p31 = scmp.ne.s32.totalorder %s23, %s26
    %p32 = scmp.eq.s32.totalorder %s13, 0
    %p33 = por %p31, %p32
    %p34 = scmp.ne.s32.totalorder %s23, %s26
    %p35 = scmp.eq.s32.totalorder %s18, 1
    %p36 = por %p34, %p35
    %p37 = scmp.ne.s32.totalorder %s26, %s27
    %p38 = scmp.eq.s32.totalorder %s18, 0
    %p39 = por %p37, %p38
    %p40 = scmp.ne.s32.totalorder %s26, %s27
    %p41 = scmp.eq.s32.totalorder %s19, 1
    %p42 = por %p40, %p41
    %p44 = scmp.ne.s32.totalorder %s27, %s43
    %p45 = scmp.eq.s32.totalorder %s19, 0
    %p46 = por %p44, %p45
    %s48 = sadd.s32 %s47, 1
    %p51 = scmp.eq.s32.totalorder %s13, 1
    %p52 = scmp.ne.s32.totalorder %s47, %s49
    %p53 = scmp.eq.s32.totalorder %s13, 0
    %p54 = por %p52, %p53
    %p55 = scmp.ne.s32.totalorder %s47, %s49
    %p56 = scmp.eq.s32.totalorder %s18, 1
    %p57 = por %p55, %p56
    %p58 = scmp.ne.s32.totalorder %s49, %s50
    %p59 = scmp.eq.s32.totalorder %s18, 0
    %p60 = por %p58, %p59
    %p61 = scmp.ne.s32.totalorder %s49, %s50
    %p62 = scmp.eq.s32.totalorder %s19, 1
    %p63 = por %p61, %p62
    %p65 = scmp.ne.s32.totalorder %s50, %s64
    %p66 = scmp.eq.s32.totalorder %s19, 0
    %p67 = por %p65, %p66
    %s69 = sadd.s32 %s68, 1
    %p72 = scmp.eq.s32.totalorder %s13, 1
    %p73 = scmp.ne.s32.totalorder %s68, %s70
    %p74 = scmp.eq.s32.totalorder %s13, 0
    %p75 = por %p73, %p74
    %p76 = scmp.ne.s32.totalorder %s68, %s70
    %p77 = scmp.eq.s32.totalorder %s18, 1
    %p78 = por %p76, %p77
    %p79 = scmp.ne.s32.totalorder %s70, %s71
    %p80 = scmp.eq.s32.totalorder %s18, 0
    %p81 = por %p79, %p80
    %p82 = scmp.ne.s32.totalorder %s70, %s71
    %p83 = scmp.eq.s32.totalorder %s19, 1
    %p84 = por %p82, %p83
    %p86 = scmp.ne.s32.totalorder %s71, %s85
    %p87 = scmp.eq.s32.totalorder %s19, 0
    %p88 = por %p86, %p87
    %s90 = sadd.s32 %s89, 1
    %p93 = scmp.eq.s32.totalorder %s13, 1
    %p94 = scmp.ne.s32.totalorder %s89, %s91
    %p95 = scmp.eq.s32.totalorder %s13, 0
    %p96 = por %p94, %p95
    %p97 = scmp.ne.s32.totalorder %s89, %s91
    %p98 = scmp.eq.s32.totalorder %s18, 1
    %p99 = por %p97, %p98
    %p100 = scmp.ne.s32.totalorder %s91, %s92
    %p101 = scmp.eq.s32.totalorder %s18, 0
    %p102 = por %p100, %p101
    %p103 = scmp.ne.s32.totalorder %s91, %s92
    %p104 = scmp.eq.s32.totalorder %s19, 1
    %p105 = por %p103, %p104
    %p107 = scmp.ne.s32.totalorder %s92, %s106
    %p108 = scmp.eq.s32.totalorder %s19, 0
    %p109 = por %p107, %p108
    %s111 = sadd.s32 %s110, 1
    %p114 = scmp.eq.s32.totalorder %s13, 1
    %p115 = scmp.ne.s32.totalorder %s110, %s112
    %p116 = scmp.eq.s32.totalorder %s13, 0
    %p117 = por %p115, %p116
    %p118 = scmp.ne.s32.totalorder %s110, %s112
    %p119 = scmp.eq.s32.totalorder %s18, 1
    %p120 = por %p118, %p119
    %p121 = scmp.ne.s32.totalorder %s112, %s113
    %p122 = scmp.eq.s32.totalorder %s18, 0
    %p123 = por %p121, %p122
    %p124 = scmp.ne.s32.totalorder %s112, %s113
    %p125 = scmp.eq.s32.totalorder %s19, 1
    %p126 = por %p124, %p125
    %p128 = scmp.ne.s32.totalorder %s113, %s127
    %p129 = scmp.eq.s32.totalorder %s19, 0
    %p130 = por %p128, %p129
    %s132 = sadd.s32 %s131, 1
    %p135 = scmp.eq.s32.totalorder %s13, 1
    %p136 = scmp.ne.s32.totalorder %s131, %s133
    %p137 = scmp.eq.s32.totalorder %s13, 0
    %p138 = por %p136, %p137
    %p139 = scmp.ne.s32.totalorder %s131, %s133
    %p140 = scmp.eq.s32.totalorder %s18, 1
    %p141 = por %p139, %p140
    %p142 = scmp.ne.s32.totalorder %s133, %s134
    %p143 = scmp.eq.s32.totalorder %s18, 0
    %p144 = por %p142, %p143
    %p145 = scmp.ne.s32.totalorder %s133, %s134
    %p146 = scmp.eq.s32.totalorder %s19, 1
    %p147 = por %p145, %p146
    %p149 = scmp.ne.s32.totalorder %s134, %s148
    %p150 = scmp.eq.s32.totalorder %s19, 0
    %p151 = por %p149, %p150
    %s153 = sadd.s32 %s152, 1
    %p156 = scmp.eq.s32.totalorder %s13, 1
    %p157 = scmp.ne.s32.totalorder %s152, %s154
    %p158 = scmp.eq.s32.totalorder %s13, 0
    %p159 = por %p157, %p158
    %p160 = scmp.ne.s32.totalorder %s152, %s154
    %p161 = scmp.eq.s32.totalorder %s18, 1
    %p162 = por %p160, %p161
    %p163 = scmp.ne.s32.totalorder %s154, %s155
    %p164 = scmp.eq.s32.totalorder %s18, 0
    %p165 = por %p163, %p164
    %p166 = scmp.ne.s32.totalorder %s154, %s155
    %p167 = scmp.eq.s32.totalorder %s19, 1
    %p168 = por %p166, %p167
    %p170 = scmp.ne.s32.totalorder %s155, %s169
    %p171 = scmp.eq.s32.totalorder %s19, 0
    %p172 = por %p170, %p171
    %s173 = ssub.s32 %s13, %s20
    %p174 = scmp.eq.s32.totalorder %s173, 0
    %s176 = sadd.s32 %s175, 1
    %s177 = scalar_select %p174, %s175, %s176
    %p180 = pneg %p174
    %p181 = scmp.eq.s32.totalorder %s13, 1
    %p182 = por %p180, %p181
    %p183 = scmp.ne.s32.totalorder %s175, %s178
    %p184 = scmp.eq.s32.totalorder %s13, 0
    %p185 = por %p183, %p184
    %p186 = scmp.ne.s32.totalorder %s175, %s178
    %p187 = scmp.eq.s32.totalorder %s18, 1
    %p188 = por %p186, %p187
    %p189 = scmp.ne.s32.totalorder %s178, %s179
    %p190 = scmp.eq.s32.totalorder %s18, 0
    %p191 = por %p189, %p190
    %p192 = scmp.ne.s32.totalorder %s178, %s179
    %p193 = scmp.eq.s32.totalorder %s19, 1
    %p194 = por %p192, %p193
    %p196 = scmp.ne.s32.totalorder %s179, %s195
    %p197 = scmp.eq.s32.totalorder %s19, 0
    %p198 = por %p196, %p197
    %p199 = scmp.le.s32.totalorder 1, %s13
    %p200 = scmp.lt.s32.totalorder %s13, 3
    %p201 = pnand %p199, %p200
    %p202 = pneg %p201
    // Predicated region
    $region9: #{style_vectorizer_forward.1} parent=5 // pred_check
      _
    $region10: #{style_vectorizer_forward.1} parent=5 // pred_check_branch
      %204 = sbr.rel (%p201) target = $region12
    $region11: #{style_vectorizer_forward.1} parent=5 // pred_region
      %s205 = ssub.s32 %s13, 1
      // Predicated region
      $region13: #{style_vectorizer_forward.1} parent=11 // pred_check
        %p206 = pneg %p60
      $region14: #{style_vectorizer_forward.1} parent=11 // pred_check_branch
        %208 = sbr.rel (%p206) target = $region16
      $region15: #{style_vectorizer_forward.1} parent=11 // pred_region
        _
      $region16: #{style_vectorizer_forward.1} parent=11 // pred_fallthru
        _
      // Predicated region
      $region17: #{style_vectorizer_forward.1} parent=11 // pred_check
        %p209 = pneg %p81
      $region18: #{style_vectorizer_forward.1} parent=11 // pred_check_branch
        %211 = sbr.rel (%p209) target = $region20
      $region19: #{style_vectorizer_forward.1} parent=11 // pred_region
        _
      $region20: #{style_vectorizer_forward.1} parent=11 // pred_fallthru
        _
      // Predicated region
      $region21: #{style_vectorizer_forward.1} parent=11 // pred_check
        %p212 = pneg %p102
      $region22: #{style_vectorizer_forward.1} parent=11 // pred_check_branch
        %214 = sbr.rel (%p212) target = $region24
      $region23: #{style_vectorizer_forward.1} parent=11 // pred_region
        _
      $region24: #{style_vectorizer_forward.1} parent=11 // pred_fallthru
        _
      // Predicated region
      $region25: #{style_vectorizer_forward.1} parent=11 // pred_check
        %p215 = pneg %p123
      $region26: #{style_vectorizer_forward.1} parent=11 // pred_check_branch
        %217 = sbr.rel (%p215) target = $region28
      $region27: #{style_vectorizer_forward.1} parent=11 // pred_region
        _
      $region28: #{style_vectorizer_forward.1} parent=11 // pred_fallthru
        _
      // Predicated region
      $region29: #{style_vectorizer_forward.1} parent=11 // pred_check
        %p218 = pneg %p144
      $region30: #{style_vectorizer_forward.1} parent=11 // pred_check_branch
        %220 = sbr.rel (%p218) target = $region32
      $region31: #{style_vectorizer_forward.1} parent=11 // pred_region
        _
      $region32: #{style_vectorizer_forward.1} parent=11 // pred_fallthru
        _
      // Predicated region
      $region33: #{style_vectorizer_forward.1} parent=11 // pred_check
        %p221 = pneg %p165
      $region34: #{style_vectorizer_forward.1} parent=11 // pred_check_branch
        %223 = sbr.rel (%p221) target = $region36
      $region35: #{style_vectorizer_forward.1} parent=11 // pred_region
        _
      $region36: #{style_vectorizer_forward.1} parent=11 // pred_fallthru
        _
    $region12: #{style_vectorizer_forward.1} parent=5 // pred_fallthru
      _
    %p224 = scmp.lt.s32.totalorder %s13, 2
    // Predicated region
    $region37: #{style_vectorizer_forward.1} parent=5 // pred_check
      %p225 = pneg %p224
    $region38: #{style_vectorizer_forward.1} parent=5 // pred_check_branch
      %227 = sbr.rel (%p225) target = $region40
    $region39: #{style_vectorizer_forward.1} parent=5 // pred_region
      // Predicated region
      $region41: #{style_vectorizer_forward.1} parent=39 // pred_check
        %p228 = pneg %p33
      $region42: #{style_vectorizer_forward.1} parent=39 // pred_check_branch
        %230 = sbr.rel (%p228) target = $region44
      $region43: #{style_vectorizer_forward.1} parent=39 // pred_region
        %p231 = scmp.lt.s32.totalorder %s13, 1
        %s232 = scalar_select %p231, %s13, 1
        %s233 = smul.addr %s232, 8
        %s234 = scalar_lea.vmem %s0, %s233
      $region44: #{style_vectorizer_forward.1} parent=39 // pred_fallthru
        _
    $region40: #{style_vectorizer_forward.1} parent=5 // pred_fallthru
      _
    %p235 = scmp.le.s32.totalorder 1, %s13
    %p236 = scmp.lt.s32.totalorder %s13, 3
    %p237 = pnand %p235, %p236
    %p238 = pneg %p237
    // Predicated region
    $region45: #{style_vectorizer_forward.1} parent=5 // pred_check
      _
    $region46: #{style_vectorizer_forward.1} parent=5 // pred_check_branch
      %240 = sbr.rel (%p237) target = $region48
    $region47: #{style_vectorizer_forward.1} parent=5 // pred_region
      %s241 = ssub.s32 %s13, 1
      %p242 = scmp.lt.s32.totalorder %s18, 1
      %s243 = scalar_select %p242, %s18, 1
      %s244 = smul.addr %s243, 8
      %s245 = scalar_lea.vmem %s0, %s244
      %p246 = pneg %p39
      %p247 = pneg %p36
      %p248 = pneg %p60
      %p249 = pneg %p57
      %p250 = pneg %p81
      %p251 = pneg %p78
      %p252 = pneg %p102
      %p253 = pneg %p99
      %p254 = pneg %p123
      %p255 = pneg %p120
      %p256 = pneg %p144
      %p257 = pneg %p141
      %p258 = pneg %p165
      %p259 = pneg %p162
      %p260 = pneg %p191
      %p261 = pneg %p188
      %p262 = scmp.lt.s32.totalorder %s18, 1
      %s263 = scalar_select %p262, %s18, 1
      %s264 = smul.addr %s263, 8
      %s265 = scalar_lea.vmem %s7, %s264
      %p266 = scmp.lt.s32.totalorder %s18, 1
      %s267 = scalar_select %p266, %s18, 1
      %s268 = smul.addr %s267, 8
      %s269 = scalar_lea.vmem %s0, %s268
      %p270 = scmp.lt.s32.totalorder %s18, 1
      %s271 = scalar_select %p270, %s18, 1
      %s272 = smul.addr %s271, 8
      %s273 = scalar_lea.vmem %s7, %s272
      %v275 = vld [vmem:[%s269] sm:$0xff]
      %v276 = vmul.f32 %v275, %v275
      %vm277 = vcmask 261120
      %v278 = vsel %vm277, %v276, 0.0
      %v279 = vrot.slane %v278, 4
      %v280 = vadd.f32 %v278, %v279
      %v281 = vrot.slane %v280, 2
      %v282 = vadd.f32 %v280, %v281
      %v283 = vrot.slane %v282, 1
      %v284 = vadd.f32 %v282, %v283
      %v285 = vmax.f32 %v284, 1e-24
      %v286 = vrsqrt.pop %v285
      %v287 = vmul.f32 %v286, %v285
      %v288 = vmul.f32 %v287, %v286
      %v289 = vmul.f32 0.5, %v288
      %v290 = vsub.f32 1.5, %v289
      %v291 = vmul.f32 %v286, %v290
      %vm292 = vweird.f32 %v285
      %vm293 = vweird.f32 %v286
      %vm294 = vmor %vm292, %vm293
      %v295 = vsel %vm294, %v286, %v291
      %v296 = vmul.f32 %v275, %v295
      %v297 = vpack.c.bf16 %v296, %v296
      %v298 = vld [vmem:[%s1] sm:$0xf]
      %v299 = vld [vmem:[%s1 + $0x4] sm:$0xf]
      %v300 = vld [vmem:[%s1 + $0x8] sm:$0xf]
      %v301 = vld [vmem:[%s1 + $0xc] sm:$0xf]
      %v302 = vld [vmem:[%s2] sm:$0x1]
      %v304 = vperm.slane %v302, 0
      %v310 = vunpack.c.l.b16 %v298
      %v311 = vunpack.c.l.b16 %v299
      %v312 = vunpack.c.l.b16 %v300
      %v313 = vunpack.c.l.b16 %v301
      %v314 = vpack.c.b16 %v311, %v310
      %v315 = vpack.c.b16 %v313, %v312
      %v319 = vsel %vm277, %v297, 0
      %321 = vmatpush.bf16.msra.mxu0 0
      %322 = vmatpush.bf16.msra.mxu0 0
      %323 = vmatpush.bf16.msra.mxu0 0
      %324 = vmatpush.bf16.msra.mxu0 0
      %325 = vmatpush.bf16.msra.mxu0 0
      %326 = vmatpush.bf16.msra.mxu0 0
      %327 = vmatpush.bf16.msra.mxu0 %v315
      %328 = vmatpush.bf16.msra.mxu0 %v314
      %329 = vmatmul.bf16.gmra.mxu0 %v319
      %v330 = vpop.f32.mrf.mxu0
      %v331 = vadd.f32 %v304, %v330
      %v332 = vpop.f32.mrf.mxu0
      %333 = vdwg.mxu0
      %vm334 = vcmp.gt.f32.partialorder %v331, 0.0
      %v335 = vmul.f32 %v331, 0.2
      %v336 = vsel %vm334, %v331, %v335
      %v337 = vpack.c.bf16 %v336, %v336
      %v338 = vld [vmem:[%s3] sm:$0xf]
      %v339 = vld [vmem:[%s3 + $0x4] sm:$0xf]
      %v340 = vld [vmem:[%s3 + $0x8] sm:$0xf]
      %v341 = vld [vmem:[%s3 + $0xc] sm:$0xf]
      %v342 = vld [vmem:[%s3 + $0x10] sm:$0xf]
      %v343 = vld [vmem:[%s3 + $0x14] sm:$0xf]
      %v344 = vld [vmem:[%s3 + $0x18] sm:$0xf]
      %v345 = vld [vmem:[%s3 + $0x1c] sm:$0xf]
      %v346 = vld [vmem:[%s3 + $0x20] sm:$0xf]
      %v347 = vld [vmem:[%s3 + $0x24] sm:$0xf]
      %v348 = vld [vmem:[%s3 + $0x28] sm:$0xf]
      %v349 = vld [vmem:[%s3 + $0x2c] sm:$0xf]
      %v350 = vld [vmem:[%s3 + $0x30] sm:$0xf]
      %v351 = vld [vmem:[%s3 + $0x34] sm:$0xf]
      %v352 = vld [vmem:[%s3 + $0x38] sm:$0xf]
      %v353 = vld [vmem:[%s3 + $0x3c] sm:$0xf]
      %v354 = vld [vmem:[%s4] sm:$0x1]
      %v356 = vperm.slane %v354, 0
      %v374 = vunpack.c.l.b16 %v338
      %v375 = vunpack.c.l.b16 %v339
      %v376 = vunpack.c.l.b16 %v340
      %v377 = vunpack.c.l.b16 %v341
      %v378 = vunpack.c.l.b16 %v342
      %v379 = vunpack.c.l.b16 %v343
      %v380 = vunpack.c.l.b16 %v344
      %v381 = vunpack.c.l.b16 %v345
      %v382 = vunpack.c.l.b16 %v346
      %v383 = vunpack.c.l.b16 %v347
      %v384 = vunpack.c.l.b16 %v348
      %v385 = vunpack.c.l.b16 %v349
      %v386 = vunpack.c.l.b16 %v350
      %v387 = vunpack.c.l.b16 %v351
      %v388 = vunpack.c.l.b16 %v352
      %v389 = vunpack.c.l.b16 %v353
      %v390 = vpack.c.b16 %v375, %v374
      %v391 = vpack.c.b16 %v377, %v376
      %v392 = vpack.c.b16 %v379, %v378
      %v393 = vpack.c.b16 %v381, %v380
      %v394 = vpack.c.b16 %v383, %v382
      %v395 = vpack.c.b16 %v385, %v384
      %v396 = vpack.c.b16 %v387, %v386
      %v397 = vpack.c.b16 %v389, %v388
      %406 = vmatpush.bf16.msra.mxu0 %v397
      %407 = vmatpush.bf16.msra.mxu0 %v396
      %408 = vmatpush.bf16.msra.mxu0 %v395
      %409 = vmatpush.bf16.msra.mxu0 %v394
      %410 = vmatpush.bf16.msra.mxu0 %v393
      %411 = vmatpush.bf16.msra.mxu0 %v392
      %412 = vmatpush.bf16.msra.mxu0 %v391
      %413 = vmatpush.bf16.msra.mxu0 %v390
      %414 = vmatmul.bf16.gmra.mxu0 %v337
      %v415 = vpop.f32.mrf.mxu0
      %v416 = vadd.f32 %v356, %v415
      %v417 = vpop.f32.mrf.mxu0
      %418 = vdwg.mxu0
      %vm419 = vcmp.gt.f32.partialorder %v416, 0.0
      %v420 = vmul.f32 %v416, 0.2
      %v421 = vsel %vm419, %v416, %v420
      %v422 = vpack.c.bf16 %v421, %v421
      %v423 = vld [vmem:[%s5] sm:$0xf]
      %v424 = vld [vmem:[%s5 + $0x4] sm:$0xf]
      %v425 = vld [vmem:[%s5 + $0x8] sm:$0xf]
      %v426 = vld [vmem:[%s5 + $0xc] sm:$0xf]
      %v427 = vld [vmem:[%s5 + $0x10] sm:$0xf]
      %v428 = vld [vmem:[%s5 + $0x14] sm:$0xf]
      %v429 = vld [vmem:[%s5 + $0x18] sm:$0xf]
      %v430 = vld [vmem:[%s5 + $0x1c] sm:$0xf]
      %v431 = vld [vmem:[%s5 + $0x20] sm:$0xf]
      %v432 = vld [vmem:[%s5 + $0x24] sm:$0xf]
      %v433 = vld [vmem:[%s5 + $0x28] sm:$0xf]
      %v434 = vld [vmem:[%s5 + $0x2c] sm:$0xf]
      %v435 = vld [vmem:[%s5 + $0x30] sm:$0xf]
      %v436 = vld [vmem:[%s5 + $0x34] sm:$0xf]
      %v437 = vld [vmem:[%s5 + $0x38] sm:$0xf]
      %v438 = vld [vmem:[%s5 + $0x3c] sm:$0xf]
      %v439 = vld [vmem:[%s6] sm:$0x1]
      %v441 = vperm.slane %v439, 0
      %v459 = vunpack.c.l.b16 %v423
      %v460 = vunpack.c.l.b16 %v424
      %v461 = vunpack.c.l.b16 %v425
      %v462 = vunpack.c.l.b16 %v426
      %v463 = vunpack.c.l.b16 %v427
      %v464 = vunpack.c.l.b16 %v428
      %v465 = vunpack.c.l.b16 %v429
      %v466 = vunpack.c.l.b16 %v430
      %v467 = vunpack.c.l.b16 %v431
      %v468 = vunpack.c.l.b16 %v432
      %v469 = vunpack.c.l.b16 %v433
      %v470 = vunpack.c.l.b16 %v434
      %v471 = vunpack.c.l.b16 %v435
      %v472 = vunpack.c.l.b16 %v436
      %v473 = vunpack.c.l.b16 %v437
      %v474 = vunpack.c.l.b16 %v438
      %v475 = vpack.c.b16 %v460, %v459
      %v476 = vpack.c.b16 %v462, %v461
      %v477 = vpack.c.b16 %v464, %v463
      %v478 = vpack.c.b16 %v466, %v465
      %v479 = vpack.c.b16 %v468, %v467
      %v480 = vpack.c.b16 %v470, %v469
      %v481 = vpack.c.b16 %v472, %v471
      %v482 = vpack.c.b16 %v474, %v473
      %491 = vmatpush.bf16.msra.mxu0 %v482
      %492 = vmatpush.bf16.msra.mxu0 %v481
      %493 = vmatpush.bf16.msra.mxu0 %v480
      %494 = vmatpush.bf16.msra.mxu0 %v479
      %495 = vmatpush.bf16.msra.mxu0 %v478
      %496 = vmatpush.bf16.msra.mxu0 %v477
      %497 = vmatpush.bf16.msra.mxu0 %v476
      %498 = vmatpush.bf16.msra.mxu0 %v475
      %499 = vmatmul.bf16.gmra.mxu0 %v422
      %v500 = vpop.f32.mrf.mxu0
      %v501 = vadd.f32 %v441, %v500
      %v502 = vpop.f32.mrf.mxu0
      %503 = vdwg.mxu0
      %vm504 = vcmp.gt.f32.partialorder %v501, 0.0
      %v505 = vmul.f32 %v501, 0.2
      %v506 = vsel %vm504, %v501, %v505
      %507 = vst [vmem:[%s273] sm:$0xff] %v506
      %p508 = scmp.lt.s32.totalorder %s18, 1
      %s509 = scalar_select %p508, %s18, 1
      %s510 = smul.addr %s509, 8
      %s511 = scalar_lea.vmem %s7, %s510
      // Predicated region
      $region49: #{style_vectorizer_forward.1} parent=47 // pred_check
        %p512 = pneg %p188
      $region50: #{style_vectorizer_forward.1} parent=47 // pred_check_branch
        %514 = sbr.rel (%p512) target = $region52
      $region51: #{style_vectorizer_forward.1} parent=47 // pred_region
        _
      $region52: #{style_vectorizer_forward.1} parent=47 // pred_fallthru
        _
    $region48: #{style_vectorizer_forward.1} parent=5 // pred_fallthru
      _
    %p515 = scmp.le.s32.totalorder 2, %s13
    // Predicated region
    $region53: #{style_vectorizer_forward.1} parent=5 // pred_check
      %p516 = pneg %p515
    $region54: #{style_vectorizer_forward.1} parent=5 // pred_check_branch
      %518 = sbr.rel (%p516) target = $region56
    $region55: #{style_vectorizer_forward.1} parent=5 // pred_region
      %s519 = ssub.s32 %s13, 2
      // Predicated region
      $region57: #{style_vectorizer_forward.1} parent=55 // pred_check
        %p520 = pneg %p194
      $region58: #{style_vectorizer_forward.1} parent=55 // pred_check_branch
        %522 = sbr.rel (%p520) target = $region60
      $region59: #{style_vectorizer_forward.1} parent=55 // pred_region
        %p523 = scmp.lt.s32.totalorder %s19, 1
        %s524 = scalar_select %p523, %s19, 1
        %s525 = smul.addr %s524, 8
        %s526 = scalar_lea.vmem %s7, %s525
      $region60: #{style_vectorizer_forward.1} parent=55 // pred_fallthru
        _
    $region56: #{style_vectorizer_forward.1} parent=5 // pred_fallthru
      _
  $region6: #{style_vectorizer_forward.1} parent=0 // loop_footer
    %s17 = sadd.s32 1, %s13
  $region7: #{style_vectorizer_forward.1} parent=0 // loop_footer_branch
    %12 = sbr.rel target = $region3
  $region8: #{style_vectorizer_forward.1} parent=0 // loop_exit
    _

</llo_original>
